<compile_context>
chip_gen: v7x
topology: tpu7x:2x2x1
jax: 0.10.0
libtpu: 0.0.40
codegen_flags: <defaults>
</compile_context>

<pallas_src>
import functools

import numpy as np
import jax
import jax.numpy as jnp
from jax.experimental import pallas as pl
from jax.experimental.pallas import tpu as pltpu

LANES = 128
MAX_TILE_ROWS = 1024  # 1024*128*4B = 512 KiB per f32 input buffer


def _partial_sums_kernel(out_ref, tgt_ref, acc_dd, acc_ot, acc_o, acc_t, *,
                         tile_rows, tiles_per_core, n_valid):
    """Accumulate lane-wise partial sums for one (tile_rows, 128) tile."""
    core = pl.program_id(0)
    step = pl.program_id(1)

    @pl.when(step == 0)
    def _():
        acc_dd[...] = jnp.zeros_like(acc_dd)
        acc_ot[...] = jnp.zeros_like(acc_ot)
        acc_o[...] = jnp.zeros_like(acc_o)
        acc_t[...] = jnp.zeros_like(acc_t)

    # Validity mask rebuilt in-kernel (no mask stream from HBM).  The *logical*
    # block id is used so clamped duplicate blocks contribute exactly zero.
    blk = core * tiles_per_core + step
    base = blk * (tile_rows * LANES)
    row = jax.lax.broadcasted_iota(jnp.int32, (tile_rows, LANES), 0)
    col = jax.lax.broadcasted_iota(jnp.int32, (tile_rows, LANES), 1)
    valid = (base + row * LANES + col) < n_valid

    o = jnp.where(valid, out_ref[...].astype(jnp.float32), 0.0)
    t = jnp.where(valid, tgt_ref[...].astype(jnp.float32), 0.0)
    d = o - t

    # Reduce over rows only; the 128-lane partials are combined in the wrapper.
    acc_dd[...] += jnp.sum(d * d, axis=0, keepdims=True)[None]
    acc_ot[...] += jnp.sum(o * t, axis=0, keepdims=True)[None]
    acc_o[...] += jnp.sum(o, axis=0, keepdims=True)[None]
    acc_t[...] += jnp.sum(t, axis=0, keepdims=True)[None]


@jax.jit
def mse_niiee_loss(output, target):
    """Pallas implementation of MSE_NIIEE.forward."""
    assert output.shape == target.shape
    n = int(np.prod(output.shape))

    flat_o = output.reshape(-1)
    flat_t = target.reshape(-1)
    rem = n % LANES
    if rem:
        # TODO(synk): this residual pad (<128 elements) still copies the
        # flattened arrays once; a 1-D-block kernel would avoid even that.
        pad = LANES - rem
        flat_o = jnp.pad(flat_o, (0, pad))
        flat_t = jnp.pad(flat_t, (0, pad))
    o2d = flat_o.reshape(-1, LANES)
    t2d = flat_t.reshape(-1, LANES)
    rows = o2d.shape[0]

    tile_rows = rows if rows <= MAX_TILE_ROWS else MAX_TILE_ROWS
    num_tiles = -(-rows // tile_rows)
    tiles_per_core = -(-num_tiles // 2)

    def in_map(c, i):
        # Clamp: when num_tiles is odd, the second core's last step re-reads
        # the final block; its contribution is masked to zero in-kernel.
        return (jnp.minimum(c * tiles_per_core + i, num_tiles - 1), 0)

    kernel = functools.partial(
        _partial_sums_kernel,
        tile_rows=tile_rows, tiles_per_core=tiles_per_core, n_valid=n)

    acc_sd = jax.ShapeDtypeStruct((2, 1, LANES), jnp.float32)
    acc_spec = pl.BlockSpec((1, 1, LANES), lambda c, i: (c, 0, 0))

    acc_dd, acc_ot, acc_o, acc_t = pl.pallas_call(
        kernel,
        out_shape=(acc_sd, acc_sd, acc_sd, acc_sd),
        grid_spec=pltpu.PrefetchScalarGridSpec(
            num_scalar_prefetch=0,
            grid=(2, tiles_per_core),
            in_specs=[
                pl.BlockSpec((tile_rows, LANES), in_map),
                pl.BlockSpec((tile_rows, LANES), in_map),
            ],
            out_specs=[acc_spec, acc_spec, acc_spec, acc_spec],
        ),
        compiler_params=pltpu.CompilerParams(
            dimension_semantics=("parallel", "arbitrary")),
    )(o2d, t2d)

    # Tiny final combine (4 x 256 floats) + scalar arithmetic in plain JAX.
    sum_sq = jnp.sum(acc_dd)
    inter = jnp.sum(acc_ot)
    union = jnp.sum(acc_o) + jnp.sum(acc_t) - inter

    mse = sum_sq / jnp.float32(n)
    niiee = 1.0 - inter / union
    return 0.1 * niiee + mse


def _reference_loss(output, target):
    o = output.astype(jnp.float32)
    t = target.astype(jnp.float32)
    mse = jnp.mean((o - t) ** 2)
    inter = jnp.sum(o * t)
    union = jnp.sum(o) + jnp.sum(t) - inter
    return 0.1 * (1.0 - inter / union) + mse


if __name__ == "__main__":
    key = jax.random.PRNGKey(0)
    k1, k2, k3, k4, k5, k6 = jax.random.split(key, 6)

    # [batch, nodes, time] — small shape consistent with mpnnlstm predictions.
    B, N, T = 2, 16, 8
    output = jax.random.normal(k1, (B, N, T), dtype=jnp.float32)
    target = jax.random.uniform(k2, (B, N, T), dtype=jnp.float32)
    loss = jax.block_until_ready(mse_niiee_loss(output, target))
    ref = _reference_loss(output, target)
    assert jnp.allclose(loss, ref, rtol=1e-5, atol=1e-5), (loss, ref)

    # Element count not a multiple of 128 (exercises the in-kernel tail mask).
    o2 = jax.random.normal(k3, (3, 10, 7), dtype=jnp.float32)
    t2 = jax.random.uniform(k4, (3, 10, 7), dtype=jnp.float32)
    loss2 = jax.block_until_ready(mse_niiee_loss(o2, t2))
    ref2 = _reference_loss(o2, t2)
    assert jnp.allclose(loss2, ref2, rtol=1e-5, atol=1e-5), (loss2, ref2)

    # Multi-tile / both-core / odd-tile-count path (still ~1.3 MB per input).
    o3 = jax.random.normal(k5, (5, 512, 128), dtype=jnp.float32)
    t3 = jax.random.uniform(k6, (5, 512, 128), dtype=jnp.float32)
    loss3 = jax.block_until_ready(mse_niiee_loss(o3, t3))
    ref3 = _reference_loss(o3, t3)
    assert jnp.allclose(loss3, ref3, rtol=1e-4, atol=1e-5), (loss3, ref3)

    # Native bf16 inputs stay bf16 on the DMA path; math is f32 in-kernel.
    ob = output.astype(jnp.bfloat16)
    tb = target.astype(jnp.bfloat16)
    lossb = jax.block_until_ready(mse_niiee_loss(ob, tb))
    refb = _reference_loss(ob, tb)
    assert jnp.allclose(lossb, refb, rtol=1e-3, atol=1e-3), (lossb, refb)

    print("KERNEL_OK")
</pallas_src>

<mosaic_0001>
module attributes {stable_mosaic.version = 11 : i64} {
  func.func @_partial_sums_kernel(%arg0: i32, %arg1: i32, %arg2: memref<2x128xf32, #tpu.memory_space<vmem>>, %arg3: memref<2x128xf32, #tpu.memory_space<vmem>>, %arg4: memref<1x1x128xf32, #tpu.memory_space<vmem>>, %arg5: memref<1x1x128xf32, #tpu.memory_space<vmem>>, %arg6: memref<1x1x128xf32, #tpu.memory_space<vmem>>, %arg7: memref<1x1x128xf32, #tpu.memory_space<vmem>>) attributes {dimension_semantics = [#tpu.dimension_semantics<parallel>, #tpu.dimension_semantics<arbitrary>], iteration_bounds = array<i64: 2, 1>, scalar_prefetch = 0 : i64, scratch_operands = 0 : i64, tpu.core_type = #tpu.core_type<tc>, window_params = [{transform_indices = @transform_0, window_bounds = array<i64: 2, 128>}, {transform_indices = @transform_1, window_bounds = array<i64: 2, 128>}, {transform_indices = @transform_2, window_bounds = array<i64: 1, 1, 128>}, {transform_indices = @transform_3, window_bounds = array<i64: 1, 1, 128>}, {transform_indices = @transform_4, window_bounds = array<i64: 1, 1, 128>}, {transform_indices = @transform_5, window_bounds = array<i64: 1, 1, 128>}]} {
    %c0_i32 = arith.constant 0 : i32
    %0 = arith.cmpi eq, %arg1, %c0_i32 : i32
    %1 = arith.extui %0 : i1 to i32
    %c0_i32_0 = arith.constant 0 : i32
    %2 = arith.cmpi ne, %1, %c0_i32_0 : i32
    scf.if %2 {
      %cst_34 = arith.constant 0.000000e+00 : f32
      %48 = vector.broadcast %cst_34 : f32 to vector<1x1x128xf32>
      %c0_35 = arith.constant 0 : index
      %c0_36 = arith.constant 0 : index
      %c0_37 = arith.constant 0 : index
      %49 = vector.load %arg4[%c0_35, %c0_36, %c0_37] : memref<1x1x128xf32, #tpu.memory_space<vmem>>, vector<1x1x128xf32>
      tpu.vector_store %arg4[%c0_35, %c0_36, %c0_37], %48 {strides = array<i32>} : memref<1x1x128xf32, #tpu.memory_space<vmem>>, vector<1x1x128xf32>,
      %cst_38 = arith.constant 0.000000e+00 : f32
      %50 = vector.broadcast %cst_38 : f32 to vector<1x1x128xf32>
      %c0_39 = arith.constant 0 : index
      %c0_40 = arith.constant 0 : index
      %c0_41 = arith.constant 0 : index
      %51 = vector.load %arg5[%c0_39, %c0_40, %c0_41] : memref<1x1x128xf32, #tpu.memory_space<vmem>>, vector<1x1x128xf32>
      tpu.vector_store %arg5[%c0_39, %c0_40, %c0_41], %50 {strides = array<i32>} : memref<1x1x128xf32, #tpu.memory_space<vmem>>, vector<1x1x128xf32>,
      %cst_42 = arith.constant 0.000000e+00 : f32
      %52 = vector.broadcast %cst_42 : f32 to vector<1x1x128xf32>
      %c0_43 = arith.constant 0 : index
      %c0_44 = arith.constant 0 : index
      %c0_45 = arith.constant 0 : index
      %53 = vector.load %arg6[%c0_43, %c0_44, %c0_45] : memref<1x1x128xf32, #tpu.memory_space<vmem>>, vector<1x1x128xf32>
      tpu.vector_store %arg6[%c0_43, %c0_44, %c0_45], %52 {strides = array<i32>} : memref<1x1x128xf32, #tpu.memory_space<vmem>>, vector<1x1x128xf32>,
      %cst_46 = arith.constant 0.000000e+00 : f32
      %54 = vector.broadcast %cst_46 : f32 to vector<1x1x128xf32>
      %c0_47 = arith.constant 0 : index
      %c0_48 = arith.constant 0 : index
      %c0_49 = arith.constant 0 : index
      %55 = vector.load %arg7[%c0_47, %c0_48, %c0_49] : memref<1x1x128xf32, #tpu.memory_space<vmem>>, vector<1x1x128xf32>
      tpu.vector_store %arg7[%c0_47, %c0_48, %c0_49], %54 {strides = array<i32>} : memref<1x1x128xf32, #tpu.memory_space<vmem>>, vector<1x1x128xf32>,
    } else {
    }
    %c1_i32 = arith.constant 1 : i32
    %3 = arith.muli %arg0, %c1_i32 : i32
    %4 = arith.addi %3, %arg1 : i32
    %c256_i32 = arith.constant 256 : i32
    %5 = arith.muli %4, %c256_i32 : i32
    %6 = tpu.iota {dimensions = array<i32: 0>} : vector<2x128xi32>
    %7 = tpu.iota {dimensions = array<i32: 1>} : vector<2x128xi32>
    %c128_i32 = arith.constant 128 : i32
    %8 = vector.broadcast %c128_i32 : i32 to vector<2x128xi32>
    %9 = arith.muli %6, %8 : vector<2x128xi32>
    %10 = vector.broadcast %5 : i32 to vector<2x128xi32>
    %11 = arith.addi %10, %9 : vector<2x128xi32>
    %12 = arith.addi %11, %7 : vector<2x128xi32>
    %c256_i32_1 = arith.constant 256 : i32
    %13 = vector.broadcast %c256_i32_1 : i32 to vector<2x128xi32>
    %14 = arith.cmpi slt, %12, %13 : vector<2x128xi32>
    %c0 = arith.constant 0 : index
    %c0_2 = arith.constant 0 : index
    %15 = vector.load %arg2[%c0, %c0_2] : memref<2x128xf32, #tpu.memory_space<vmem>>, vector<2x128xf32>
    %cst = arith.constant 0.000000e+00 : f32
    %16 = vector.broadcast %cst : f32 to vector<2x128xf32>
    %17 = arith.select %14, %15, %16 : vector<2x128xi1>, vector<2x128xf32>
    %c0_3 = arith.constant 0 : index
    %c0_4 = arith.constant 0 : index
    %18 = vector.load %arg3[%c0_3, %c0_4] : memref<2x128xf32, #tpu.memory_space<vmem>>, vector<2x128xf32>
    %cst_5 = arith.constant 0.000000e+00 : f32
    %19 = vector.broadcast %cst_5 : f32 to vector<2x128xf32>
    %20 = arith.select %14, %18, %19 : vector<2x128xi1>, vector<2x128xf32>
    %21 = arith.subf %17, %20 : vector<2x128xf32>
    %c0_6 = arith.constant 0 : index
    %c0_7 = arith.constant 0 : index
    %c0_8 = arith.constant 0 : index
    %22 = vector.load %arg4[%c0_6, %c0_7, %c0_8] : memref<1x1x128xf32, #tpu.memory_space<vmem>>, vector<1x1x128xf32>
    %23 = arith.mulf %21, %21 : vector<2x128xf32>
    %cst_9 = arith.constant dense<0.000000e+00> : vector<128xf32>
    %24 = vector.multi_reduction <add>, %23, %cst_9 [0] : vector<2x128xf32> to vector<128xf32>
    %25 = vector.shape_cast %24 : vector<128xf32> to vector<1x128xf32>
    %26 = vector.shape_cast %25 : vector<1x128xf32> to vector<1x1x128xf32>
    %27 = arith.addf %22, %26 : vector<1x1x128xf32>
    %c0_10 = arith.constant 0 : index
    %c0_11 = arith.constant 0 : index
    %c0_12 = arith.constant 0 : index
    %28 = vector.load %arg4[%c0_10, %c0_11, %c0_12] : memref<1x1x128xf32, #tpu.memory_space<vmem>>, vector<1x1x128xf32>
    tpu.vector_store %arg4[%c0_10, %c0_11, %c0_12], %27 {strides = array<i32>} : memref<1x1x128xf32, #tpu.memory_space<vmem>>, vector<1x1x128xf32>,
    %c0_13 = arith.constant 0 : index
    %c0_14 = arith.constant 0 : index
    %c0_15 = arith.constant 0 : index
    %29 = vector.load %arg5[%c0_13, %c0_14, %c0_15] : memref<1x1x128xf32, #tpu.memory_space<vmem>>, vector<1x1x128xf32>
    %30 = arith.mulf %17, %20 : vector<2x128xf32>
    %cst_16 = arith.constant dense<0.000000e+00> : vector<128xf32>
    %31 = vector.multi_reduction <add>, %30, %cst_16 [0] : vector<2x128xf32> to vector<128xf32>
    %32 = vector.shape_cast %31 : vector<128xf32> to vector<1x128xf32>
    %33 = vector.shape_cast %32 : vector<1x128xf32> to vector<1x1x128xf32>
    %34 = arith.addf %29, %33 : vector<1x1x128xf32>
    %c0_17 = arith.constant 0 : index
    %c0_18 = arith.constant 0 : index
    %c0_19 = arith.constant 0 : index
    %35 = vector.load %arg5[%c0_17, %c0_18, %c0_19] : memref<1x1x128xf32, #tpu.memory_space<vmem>>, vector<1x1x128xf32>
    tpu.vector_store %arg5[%c0_17, %c0_18, %c0_19], %34 {strides = array<i32>} : memref<1x1x128xf32, #tpu.memory_space<vmem>>, vector<1x1x128xf32>,
    %c0_20 = arith.constant 0 : index
    %c0_21 = arith.constant 0 : index
    %c0_22 = arith.constant 0 : index
    %36 = vector.load %arg6[%c0_20, %c0_21, %c0_22] : memref<1x1x128xf32, #tpu.memory_space<vmem>>, vector<1x1x128xf32>
    %cst_23 = arith.constant dense<0.000000e+00> : vector<128xf32>
    %37 = vector.multi_reduction <add>, %17, %cst_23 [0] : vector<2x128xf32> to vector<128xf32>
    %38 = vector.shape_cast %37 : vector<128xf32> to vector<1x128xf32>
    %39 = vector.shape_cast %38 : vector<1x128xf32> to vector<1x1x128xf32>
    %40 = arith.addf %36, %39 : vector<1x1x128xf32>
    %c0_24 = arith.constant 0 : index
    %c0_25 = arith.constant 0 : index
    %c0_26 = arith.constant 0 : index
    %41 = vector.load %arg6[%c0_24, %c0_25, %c0_26] : memref<1x1x128xf32, #tpu.memory_space<vmem>>, vector<1x1x128xf32>
    tpu.vector_store %arg6[%c0_24, %c0_25, %c0_26], %40 {strides = array<i32>} : memref<1x1x128xf32, #tpu.memory_space<vmem>>, vector<1x1x128xf32>,
    %c0_27 = arith.constant 0 : index
    %c0_28 = arith.constant 0 : index
    %c0_29 = arith.constant 0 : index
    %42 = vector.load %arg7[%c0_27, %c0_28, %c0_29] : memref<1x1x128xf32, #tpu.memory_space<vmem>>, vector<1x1x128xf32>
    %cst_30 = arith.constant dense<0.000000e+00> : vector<128xf32>
    %43 = vector.multi_reduction <add>, %20, %cst_30 [0] : vector<2x128xf32> to vector<128xf32>
    %44 = vector.shape_cast %43 : vector<128xf32> to vector<1x128xf32>
    %45 = vector.shape_cast %44 : vector<1x128xf32> to vector<1x1x128xf32>
    %46 = arith.addf %42, %45 : vector<1x1x128xf32>
    %c0_31 = arith.constant 0 : index
    %c0_32 = arith.constant 0 : index
    %c0_33 = arith.constant 0 : index
    %47 = vector.load %arg7[%c0_31, %c0_32, %c0_33] : memref<1x1x128xf32, #tpu.memory_space<vmem>>, vector<1x1x128xf32>
    tpu.vector_store %arg7[%c0_31, %c0_32, %c0_33], %46 {strides = array<i32>} : memref<1x1x128xf32, #tpu.memory_space<vmem>>, vector<1x1x128xf32>,
    return
  }
  func.func @transform_0(%arg0: i32, %arg1: i32) -> (i32, i32) {
    %c1_i32 = arith.constant 1 : i32
    %0 = arith.muli %arg0, %c1_i32 : i32
    %1 = arith.addi %0, %arg1 : i32
    %c0_i32 = arith.constant 0 : i32
    %2 = arith.minsi %1, %c0_i32 : i32
    %c0_i32_0 = arith.constant 0 : i32
    %c0_i32_1 = arith.constant 0 : i32
    return %2, %c0_i32_0 : i32, i32
  }
  func.func @transform_1(%arg0: i32, %arg1: i32) -> (i32, i32) {
    %c1_i32 = arith.constant 1 : i32
    %0 = arith.muli %arg0, %c1_i32 : i32
    %1 = arith.addi %0, %arg1 : i32
    %c0_i32 = arith.constant 0 : i32
    %2 = arith.minsi %1, %c0_i32 : i32
    %c0_i32_0 = arith.constant 0 : i32
    %c0_i32_1 = arith.constant 0 : i32
    return %2, %c0_i32_0 : i32, i32
  }
  func.func @transform_2(%arg0: i32, %arg1: i32) -> (i32, i32, i32) {
    %c0_i32 = arith.constant 0 : i32
    %c0_i32_0 = arith.constant 0 : i32
    %c0_i32_1 = arith.constant 0 : i32
    return %arg0, %c0_i32, %c0_i32_0 : i32, i32, i32
  }
  func.func @transform_3(%arg0: i32, %arg1: i32) -> (i32, i32, i32) {
    %c0_i32 = arith.constant 0 : i32
    %c0_i32_0 = arith.constant 0 : i32
    %c0_i32_1 = arith.constant 0 : i32
    return %arg0, %c0_i32, %c0_i32_0 : i32, i32, i32
  }
  func.func @transform_4(%arg0: i32, %arg1: i32) -> (i32, i32, i32) {
    %c0_i32 = arith.constant 0 : i32
    %c0_i32_0 = arith.constant 0 : i32
    %c0_i32_1 = arith.constant 0 : i32
    return %arg0, %c0_i32, %c0_i32_0 : i32, i32, i32
  }
  func.func @transform_5(%arg0: i32, %arg1: i32) -> (i32, i32, i32) {
    %c0_i32 = arith.constant 0 : i32
    %c0_i32_0 = arith.constant 0 : i32
    %c0_i32_1 = arith.constant 0 : i32
    return %arg0, %c0_i32, %c0_i32_0 : i32, i32, i32
  }
}

</mosaic_0001>

<llo_original>
// kernel: mse_niiee_loss.1
$region0: #{mse_niiee_loss.1}
  #allocation0 [shape = 'u32[]', space=smem, size = 0x4, offset = 0x4, fixed_abs, tag = 'smem constant byte address 0x4 - core index']
  #allocation1 [shape = 'u32[144,128]{1,0:T(1,128)}', space=vmem, size = 0x12000, scoped, tag = 'internal scratch']
  %s0 = inlined_call_operand.vmem [shape: f32[2,128], index: 0, kind: input, shape index: {}]
  %s1 = inlined_call_operand.vmem [shape: f32[2,128], index: 1, kind: input, shape index: {}]
  %s2 = inlined_call_operand.vmem [shape: f32[2,1,128], index: 2, kind: output, shape index: {0}]
  %s3 = inlined_call_operand.vmem [shape: f32[2,1,128], index: 3, kind: output, shape index: {1}]
  %s4 = inlined_call_operand.vmem [shape: f32[2,1,128], index: 4, kind: output, shape index: {2}]
  %s5 = inlined_call_operand.vmem [shape: f32[2,1,128], index: 5, kind: output, shape index: {3}]
  %6 = xla_tuple %s2, %s3, %s4, %s5
  %s7 = sld [smem:[#allocation0]]
  $region69: #{mse_niiee_loss.1} parent=0
    _
  %s9 = ssub.s32 1, %s7
  %s10 = scalar_select 0, %s9, %s7
  loop: start=0, step=1, limit=4
  $region2: #{mse_niiee_loss.1} parent=0 // loop_pre_header
    _
  $region3: #{mse_niiee_loss.1} parent=0 // loop_header
    %s12 = sphi 0, %s16
    %p13 = scmp.ge.s32.totalorder %s12, 4
    %s19 = sphi 0, %s31
    %s20 = sphi 0, %s27
    %s21 = sphi 0, %s19
    %s22 = sphi 0, %s20
    %s23 = sphi 0, %s21
    %s24 = sphi 0, %s22
    %s40 = sphi 0, %s42
    %s43 = sphi 0, %s40
    %s44 = sphi 0, %s43
    %s60 = sphi 0, %s44
    %s72 = sphi 0, %s74
    %s75 = sphi 0, %s72
    %s76 = sphi 0, %s75
    %s92 = sphi 0, %s76
    %s98 = sphi 0, %s100
    %s101 = sphi 0, %s98
    %s102 = sphi 0, %s101
    %s118 = sphi 0, %s102
    %s124 = sphi 0, %s126
    %s127 = sphi 0, %s124
    %s128 = sphi 0, %s127
    %s144 = sphi 0, %s128
    %s150 = sphi 0, %s152
    %s153 = sphi 0, %s150
    %s154 = sphi 0, %s153
    %s170 = sphi 0, %s154
    %s176 = sphi 0, %s178
    %s179 = sphi 0, %s176
    %s180 = sphi 0, %s179
    %s196 = sphi 0, %s180
  $region4: #{mse_niiee_loss.1} parent=0 // loop_header_branch
    %15 = sbr.rel (%p13) target = $region8
  $region5: #{mse_niiee_loss.1} parent=0 // loop_body
    %s17 = ssub.s32 %s12, 1
    %s18 = ssub.s32 %s12, 2
    %s25 = sadd.s32 1, %s20
    %p26 = scmp.ge.s32.totalorder %s25, 1
    %s27 = scalar_select %p26, 0, %s25
    %s28 = sadd.s32 1, %s19
    %s29 = scalar_select %p26, %s28, %s19
    %p30 = scmp.ge.s32.totalorder %s29, 2
    %s31 = scalar_select %p30, 0, %s29
    %s32 = sadd.s32 %s19, %s20
    %p33 = scmp.lt.s32.totalorder %s32, 0
    %s34 = scalar_select %p33, %s32, 0
    %s35 = sadd.s32 %s31, %s27
    %p36 = scmp.lt.s32.totalorder %s35, 0
    %s37 = scalar_select %p36, %s35, 0
    %s38 = ssub.s32 %s34, %s37
    %p39 = scmp.eq.s32.totalorder %s38, 0
    %s41 = sadd.s32 %s40, 1
    %s42 = scalar_select %p39, %s40, %s41
    %p45 = pneg %p39
    %p46 = scmp.eq.s32.totalorder %s12, 1
    %p47 = por %p45, %p46
    %p48 = scmp.ne.s32.totalorder %s40, %s43
    %p49 = scmp.eq.s32.totalorder %s12, 0
    %p50 = por %p48, %p49
    %p51 = scmp.ne.s32.totalorder %s40, %s43
    %p52 = scmp.eq.s32.totalorder %s17, 1
    %p53 = por %p51, %p52
    %p54 = scmp.ne.s32.totalorder %s43, %s44
    %p55 = scmp.eq.s32.totalorder %s17, 0
    %p56 = por %p54, %p55
    %p57 = scmp.ne.s32.totalorder %s43, %s44
    %p58 = scmp.eq.s32.totalorder %s18, 1
    %p59 = por %p57, %p58
    %p61 = scmp.ne.s32.totalorder %s44, %s60
    %p62 = scmp.eq.s32.totalorder %s18, 0
    %p63 = por %p61, %p62
    %s64 = sadd.s32 %s19, %s20
    %p65 = scmp.lt.s32.totalorder %s64, 0
    %s66 = scalar_select %p65, %s64, 0
    %s67 = sadd.s32 %s31, %s27
    %p68 = scmp.lt.s32.totalorder %s67, 0
    %s69 = scalar_select %p68, %s67, 0
    %s70 = ssub.s32 %s66, %s69
    %p71 = scmp.eq.s32.totalorder %s70, 0
    %s73 = sadd.s32 %s72, 1
    %s74 = scalar_select %p71, %s72, %s73
    %p77 = pneg %p71
    %p78 = scmp.eq.s32.totalorder %s12, 1
    %p79 = por %p77, %p78
    %p80 = scmp.ne.s32.totalorder %s72, %s75
    %p81 = scmp.eq.s32.totalorder %s12, 0
    %p82 = por %p80, %p81
    %p83 = scmp.ne.s32.totalorder %s72, %s75
    %p84 = scmp.eq.s32.totalorder %s17, 1
    %p85 = por %p83, %p84
    %p86 = scmp.ne.s32.totalorder %s75, %s76
    %p87 = scmp.eq.s32.totalorder %s17, 0
    %p88 = por %p86, %p87
    %p89 = scmp.ne.s32.totalorder %s75, %s76
    %p90 = scmp.eq.s32.totalorder %s18, 1
    %p91 = por %p89, %p90
    %p93 = scmp.ne.s32.totalorder %s76, %s92
    %p94 = scmp.eq.s32.totalorder %s18, 0
    %p95 = por %p93, %p94
    %s96 = ssub.s32 %s19, %s31
    %p97 = scmp.eq.s32.totalorder %s96, 0
    %s99 = sadd.s32 %s98, 1
    %s100 = scalar_select %p97, %s98, %s99
    %p103 = pneg %p97
    %p104 = scmp.eq.s32.totalorder %s12, 1
    %p105 = por %p103, %p104
    %p106 = scmp.ne.s32.totalorder %s98, %s101
    %p107 = scmp.eq.s32.totalorder %s12, 0
    %p108 = por %p106, %p107
    %p109 = scmp.ne.s32.totalorder %s98, %s101
    %p110 = scmp.eq.s32.totalorder %s17, 1
    %p111 = por %p109, %p110
    %p112 = scmp.ne.s32.totalorder %s101, %s102
    %p113 = scmp.eq.s32.totalorder %s17, 0
    %p114 = por %p112, %p113
    %p115 = scmp.ne.s32.totalorder %s101, %s102
    %p116 = scmp.eq.s32.totalorder %s18, 1
    %p117 = por %p115, %p116
    %p119 = scmp.ne.s32.totalorder %s102, %s118
    %p120 = scmp.eq.s32.totalorder %s18, 0
    %p121 = por %p119, %p120
    %s122 = ssub.s32 %s19, %s31
    %p123 = scmp.eq.s32.totalorder %s122, 0
    %s125 = sadd.s32 %s124, 1
    %s126 = scalar_select %p123, %s124, %s125
    %p129 = pneg %p123
    %p130 = scmp.eq.s32.totalorder %s12, 1
    %p131 = por %p129, %p130
    %p132 = scmp.ne.s32.totalorder %s124, %s127
    %p133 = scmp.eq.s32.totalorder %s12, 0
    %p134 = por %p132, %p133
    %p135 = scmp.ne.s32.totalorder %s124, %s127
    %p136 = scmp.eq.s32.totalorder %s17, 1
    %p137 = por %p135, %p136
    %p138 = scmp.ne.s32.totalorder %s127, %s128
    %p139 = scmp.eq.s32.totalorder %s17, 0
    %p140 = por %p138, %p139
    %p141 = scmp.ne.s32.totalorder %s127, %s128
    %p142 = scmp.eq.s32.totalorder %s18, 1
    %p143 = por %p141, %p142
    %p145 = scmp.ne.s32.totalorder %s128, %s144
    %p146 = scmp.eq.s32.totalorder %s18, 0
    %p147 = por %p145, %p146
    %s148 = ssub.s32 %s19, %s31
    %p149 = scmp.eq.s32.totalorder %s148, 0
    %s151 = sadd.s32 %s150, 1
    %s152 = scalar_select %p149, %s150, %s151
    %p155 = pneg %p149
    %p156 = scmp.eq.s32.totalorder %s12, 1
    %p157 = por %p155, %p156
    %p158 = scmp.ne.s32.totalorder %s150, %s153
    %p159 = scmp.eq.s32.totalorder %s12, 0
    %p160 = por %p158, %p159
    %p161 = scmp.ne.s32.totalorder %s150, %s153
    %p162 = scmp.eq.s32.totalorder %s17, 1
    %p163 = por %p161, %p162
    %p164 = scmp.ne.s32.totalorder %s153, %s154
    %p165 = scmp.eq.s32.totalorder %s17, 0
    %p166 = por %p164, %p165
    %p167 = scmp.ne.s32.totalorder %s153, %s154
    %p168 = scmp.eq.s32.totalorder %s18, 1
    %p169 = por %p167, %p168
    %p171 = scmp.ne.s32.totalorder %s154, %s170
    %p172 = scmp.eq.s32.totalorder %s18, 0
    %p173 = por %p171, %p172
    %s174 = ssub.s32 %s19, %s31
    %p175 = scmp.eq.s32.totalorder %s174, 0
    %s177 = sadd.s32 %s176, 1
    %s178 = scalar_select %p175, %s176, %s177
    %p181 = pneg %p175
    %p182 = scmp.eq.s32.totalorder %s12, 1
    %p183 = por %p181, %p182
    %p184 = scmp.ne.s32.totalorder %s176, %s179
    %p185 = scmp.eq.s32.totalorder %s12, 0
    %p186 = por %p184, %p185
    %p187 = scmp.ne.s32.totalorder %s176, %s179
    %p188 = scmp.eq.s32.totalorder %s17, 1
    %p189 = por %p187, %p188
    %p190 = scmp.ne.s32.totalorder %s179, %s180
    %p191 = scmp.eq.s32.totalorder %s17, 0
    %p192 = por %p190, %p191
    %p193 = scmp.ne.s32.totalorder %s179, %s180
    %p194 = scmp.eq.s32.totalorder %s18, 1
    %p195 = por %p193, %p194
    %p197 = scmp.ne.s32.totalorder %s180, %s196
    %p198 = scmp.eq.s32.totalorder %s18, 0
    %p199 = por %p197, %p198
    %p200 = scmp.le.s32.totalorder 1, %s12
    %p201 = scmp.lt.s32.totalorder %s12, 3
    %p202 = pnand %p200, %p201
    %p203 = pneg %p202
    // Predicated region
    $region9: #{mse_niiee_loss.1} parent=5 // pred_check
      _
    $region10: #{mse_niiee_loss.1} parent=5 // pred_check_branch
      %205 = sbr.rel (%p202) target = $region12
    $region11: #{mse_niiee_loss.1} parent=5 // pred_region
      %s206 = ssub.s32 %s12, 1
    $region12: #{mse_niiee_loss.1} parent=5 // pred_fallthru
      _
    %p207 = scmp.lt.s32.totalorder %s12, 2
    // Predicated region
    $region13: #{mse_niiee_loss.1} parent=5 // pred_check
      %p208 = pneg %p207
    $region14: #{mse_niiee_loss.1} parent=5 // pred_check_branch
      %210 = sbr.rel (%p208) target = $region16
    $region15: #{mse_niiee_loss.1} parent=5 // pred_region
      // Predicated region
      $region17: #{mse_niiee_loss.1} parent=15 // pred_check
        %p211 = pneg %p50
      $region18: #{mse_niiee_loss.1} parent=15 // pred_check_branch
        %213 = sbr.rel (%p211) target = $region20
      $region19: #{mse_niiee_loss.1} parent=15 // pred_region
        %s214 = sadd.s32 %s19, %s20
        %p215 = scmp.lt.s32.totalorder %s214, 0
        %s216 = scalar_select %p215, %s214, 0
        %p217 = scmp.lt.s32.totalorder %s216, 0
        %s218 = scalar_select %p217, %s216, 0
        %s219 = smul.addr %s218, 2
        %s220 = scalar_lea.vmem %s0, %s219
        %s221 = sadd.s32 %s19, %s20
        %p222 = scmp.lt.s32.totalorder %s221, 0
        %s223 = scalar_select %p222, %s221, 0
      $region20: #{mse_niiee_loss.1} parent=15 // pred_fallthru
        _
      // Predicated region
      $region21: #{mse_niiee_loss.1} parent=15 // pred_check
        %p224 = pneg %p82
      $region22: #{mse_niiee_loss.1} parent=15 // pred_check_branch
        %226 = sbr.rel (%p224) target = $region24
      $region23: #{mse_niiee_loss.1} parent=15 // pred_region
        %s227 = sadd.s32 %s19, %s20
        %p228 = scmp.lt.s32.totalorder %s227, 0
        %s229 = scalar_select %p228, %s227, 0
        %p230 = scmp.lt.s32.totalorder %s229, 0
        %s231 = scalar_select %p230, %s229, 0
        %s232 = smul.addr %s231, 2
        %s233 = scalar_lea.vmem %s1, %s232
        %s234 = sadd.s32 %s19, %s20
        %p235 = scmp.lt.s32.totalorder %s234, 0
        %s236 = scalar_select %p235, %s234, 0
      $region24: #{mse_niiee_loss.1} parent=15 // pred_fallthru
        _
    $region16: #{mse_niiee_loss.1} parent=5 // pred_fallthru
      _
    %p237 = scmp.le.s32.totalorder 1, %s12
    %p238 = scmp.lt.s32.totalorder %s12, 3
    %p239 = pnand %p237, %p238
    %p240 = pneg %p239
    // Predicated region
    $region25: #{mse_niiee_loss.1} parent=5 // pred_check
      _
    $region26: #{mse_niiee_loss.1} parent=5 // pred_check_branch
      %242 = sbr.rel (%p239) target = $region28
    $region27: #{mse_niiee_loss.1} parent=5 // pred_region
      %s243 = ssub.s32 %s12, 1
      %s244 = sadd.s32 %s21, %s22
      %p245 = scmp.lt.s32.totalorder %s244, 0
      %s246 = scalar_select %p245, %s244, 0
      %p247 = scmp.lt.s32.totalorder %s246, 0
      %s248 = scalar_select %p247, %s246, 0
      %s249 = smul.addr %s248, 2
      %s250 = scalar_lea.vmem %s0, %s249
      %p251 = pneg %p56
      %p252 = pneg %p53
      %s253 = sadd.s32 %s21, %s22
      %p254 = scmp.lt.s32.totalorder %s253, 0
      %s255 = scalar_select %p254, %s253, 0
      %p256 = scmp.lt.s32.totalorder %s255, 0
      %s257 = scalar_select %p256, %s255, 0
      %s258 = smul.addr %s257, 2
      %s259 = scalar_lea.vmem %s1, %s258
      %p260 = pneg %p88
      %p261 = pneg %p85
      %p262 = pneg %p114
      %p263 = pneg %p111
      %p264 = scmp.lt.s32.totalorder %s21, 1
      %s265 = scalar_select %p264, %s21, 1
      %s266 = scalar_lea.vmem %s2, %s265
      %p267 = pneg %p140
      %p268 = pneg %p137
      %p269 = scmp.lt.s32.totalorder %s21, 1
      %s270 = scalar_select %p269, %s21, 1
      %s271 = scalar_lea.vmem %s3, %s270
      %p272 = pneg %p166
      %p273 = pneg %p163
      %p274 = scmp.lt.s32.totalorder %s21, 1
      %s275 = scalar_select %p274, %s21, 1
      %s276 = scalar_lea.vmem %s4, %s275
      %p277 = pneg %p192
      %p278 = pneg %p189
      %p279 = scmp.lt.s32.totalorder %s21, 1
      %s280 = scalar_select %p279, %s21, 1
      %s281 = scalar_lea.vmem %s5, %s280
      %s282 = sadd.s32 %s21, %s22
      %p283 = scmp.lt.s32.totalorder %s282, 0
      %s284 = scalar_select %p283, %s282, 0
      %p285 = scmp.lt.s32.totalorder %s284, 0
      %s286 = scalar_select %p285, %s284, 0
      %s287 = smul.addr %s286, 2
      %s288 = scalar_lea.vmem %s0, %s287
      %s289 = sadd.s32 %s21, %s22
      %p290 = scmp.lt.s32.totalorder %s289, 0
      %s291 = scalar_select %p290, %s289, 0
      %s292 = sadd.s32 %s21, %s22
      %p293 = scmp.lt.s32.totalorder %s292, 0
      %s294 = scalar_select %p293, %s292, 0
      %p295 = scmp.lt.s32.totalorder %s294, 0
      %s296 = scalar_select %p295, %s294, 0
      %s297 = smul.addr %s296, 2
      %s298 = scalar_lea.vmem %s1, %s297
      %s299 = sadd.s32 %s21, %s22
      %p300 = scmp.lt.s32.totalorder %s299, 0
      %s301 = scalar_select %p300, %s299, 0
      %p302 = scmp.lt.s32.totalorder %s21, 1
      %s303 = scalar_select %p302, %s21, 1
      %s304 = scalar_lea.vmem %s2, %s303
      %p305 = scmp.lt.s32.totalorder %s21, 1
      %s306 = scalar_select %p305, %s21, 1
      %s307 = scalar_lea.vmem %s3, %s306
      %p308 = scmp.lt.s32.totalorder %s21, 1
      %s309 = scalar_select %p308, %s21, 1
      %s310 = scalar_lea.vmem %s4, %s309
      %p311 = scmp.lt.s32.totalorder %s21, 1
      %s312 = scalar_select %p311, %s21, 1
      %s313 = scalar_lea.vmem %s5, %s312
      %p314 = scmp.eq.s32.totalorder %s22, 0
      // Predicated region
      $region29: #{mse_niiee_loss.1} parent=27 // pred_check
        %p315 = pneg %p314
      $region30: #{mse_niiee_loss.1} parent=27 // pred_check_branch
        %317 = sbr.rel (%p315) target = $region32
      $region31: #{mse_niiee_loss.1} parent=27 // pred_region
        %318 = vst [vmem:[%s304] sm:$0x1] 0.0
        %319 = vst [vmem:[%s307] sm:$0x1] 0.0
        %320 = vst [vmem:[%s310] sm:$0x1] 0.0
        %321 = vst [vmem:[%s313] sm:$0x1] 0.0
      $region32: #{mse_niiee_loss.1} parent=27 // pred_fallthru
        _
      %s322 = sadd.s32 %s21, %s22
      %s323 = smul.u32 %s322, 256
      %v324 = vlaneseq
      %v325 = vshrl.u32 %v324, 7
      %v326 = vlaneseq
      %v327 = vand.u32 %v326, 127
      %v328 = vmul.u32 %v325, 128
      %v329 = vstv %s323
      %v330 = vadd.s32 %v329, %v328
      %v331 = vadd.s32 %v330, %v327
      %vm332 = vcmp.lt.s32.totalorder %v331, 256
      %v333 = vld [vmem:[%s288] sm:$0x3]
      %v334 = vsel %vm332, %v333, 0.0
      %v335 = vld [vmem:[%s298] sm:$0x3]
      %v336 = vsel %vm332, %v335, 0.0
      %v337 = vsub.f32 %v334, %v336
      %v338 = vld [vmem:[%s304] sm:$0x1]
      %v339 = vmul.f32 %v337, %v337
      %vm340 = vcmask 1041408
      %v341 = vsel %vm340, %v339, 0.0
      %v342 = vrot.slane %v341, 4
      %v343 = vadd.f32 %v341, %v342
      %v344 = vrot.slane %v343, 2
      %v345 = vadd.f32 %v343, %v344
      %v346 = vrot.slane %v345, 1
      %v347 = vadd.f32 %v345, %v346
      %v348 = vadd.f32 %v338, %v347
      %349 = vst [vmem:[%s304] sm:$0x1] %v348
      %v350 = vld [vmem:[%s307] sm:$0x1]
      %v351 = vmul.f32 %v334, %v336
      %v352 = vsel %vm340, %v351, 0.0
      %v353 = vrot.slane %v352, 4
      %v354 = vadd.f32 %v352, %v353
      %v355 = vrot.slane %v354, 2
      %v356 = vadd.f32 %v354, %v355
      %v357 = vrot.slane %v356, 1
      %v358 = vadd.f32 %v356, %v357
      %v359 = vadd.f32 %v350, %v358
      %360 = vst [vmem:[%s307] sm:$0x1] %v359
      %v361 = vld [vmem:[%s310] sm:$0x1]
      %v362 = vsel %vm340, %v334, 0.0
      %v363 = vrot.slane %v362, 4
      %v364 = vadd.f32 %v362, %v363
      %v365 = vrot.slane %v364, 2
      %v366 = vadd.f32 %v364, %v365
      %v367 = vrot.slane %v366, 1
      %v368 = vadd.f32 %v366, %v367
      %v369 = vadd.f32 %v361, %v368
      %370 = vst [vmem:[%s310] sm:$0x1] %v369
      %v371 = vld [vmem:[%s313] sm:$0x1]
      %v372 = vsel %vm340, %v336, 0.0
      %v373 = vrot.slane %v372, 4
      %v374 = vadd.f32 %v372, %v373
      %v375 = vrot.slane %v374, 2
      %v376 = vadd.f32 %v374, %v375
      %v377 = vrot.slane %v376, 1
      %v378 = vadd.f32 %v376, %v377
      %v379 = vadd.f32 %v371, %v378
      %380 = vst [vmem:[%s313] sm:$0x1] %v379
      %p381 = scmp.lt.s32.totalorder %s21, 1
      %s382 = scalar_select %p381, %s21, 1
      %s383 = scalar_lea.vmem %s2, %s382
      %p384 = scmp.lt.s32.totalorder %s21, 1
      %s385 = scalar_select %p384, %s21, 1
      %s386 = scalar_lea.vmem %s3, %s385
      %p387 = scmp.lt.s32.totalorder %s21, 1
      %s388 = scalar_select %p387, %s21, 1
      %s389 = scalar_lea.vmem %s4, %s388
      %p390 = scmp.lt.s32.totalorder %s21, 1
      %s391 = scalar_select %p390, %s21, 1
      %s392 = scalar_lea.vmem %s5, %s391
      // Predicated region
      $region33: #{mse_niiee_loss.1} parent=27 // pred_check
        %p393 = pneg %p111
      $region34: #{mse_niiee_loss.1} parent=27 // pred_check_branch
        %395 = sbr.rel (%p393) target = $region36
      $region35: #{mse_niiee_loss.1} parent=27 // pred_region
        _
      $region36: #{mse_niiee_loss.1} parent=27 // pred_fallthru
        _
      // Predicated region
      $region37: #{mse_niiee_loss.1} parent=27 // pred_check
        %p396 = pneg %p137
      $region38: #{mse_niiee_loss.1} parent=27 // pred_check_branch
        %398 = sbr.rel (%p396) target = $region40
      $region39: #{mse_niiee_loss.1} parent=27 // pred_region
        _
      $region40: #{mse_niiee_loss.1} parent=27 // pred_fallthru
        _
      // Predicated region
      $region41: #{mse_niiee_loss.1} parent=27 // pred_check
        %p399 = pneg %p163
      $region42: #{mse_niiee_loss.1} parent=27 // pred_check_branch
        %401 = sbr.rel (%p399) target = $region44
      $region43: #{mse_niiee_loss.1} parent=27 // pred_region
        _
      $region44: #{mse_niiee_loss.1} parent=27 // pred_fallthru
        _
      // Predicated region
      $region45: #{mse_niiee_loss.1} parent=27 // pred_check
        %p402 = pneg %p189
      $region46: #{mse_niiee_loss.1} parent=27 // pred_check_branch
        %404 = sbr.rel (%p402) target = $region48
      $region47: #{mse_niiee_loss.1} parent=27 // pred_region
        _
      $region48: #{mse_niiee_loss.1} parent=27 // pred_fallthru
        _
    $region28: #{mse_niiee_loss.1} parent=5 // pred_fallthru
      _
    %p405 = scmp.le.s32.totalorder 2, %s12
    // Predicated region
    $region49: #{mse_niiee_loss.1} parent=5 // pred_check
      %p406 = pneg %p405
    $region50: #{mse_niiee_loss.1} parent=5 // pred_check_branch
      %408 = sbr.rel (%p406) target = $region52
    $region51: #{mse_niiee_loss.1} parent=5 // pred_region
      %s409 = ssub.s32 %s12, 2
      // Predicated region
      $region53: #{mse_niiee_loss.1} parent=51 // pred_check
        %p410 = pneg %p117
      $region54: #{mse_niiee_loss.1} parent=51 // pred_check_branch
        %412 = sbr.rel (%p410) target = $region56
      $region55: #{mse_niiee_loss.1} parent=51 // pred_region
        %p413 = scmp.lt.s32.totalorder %s23, 1
        %s414 = scalar_select %p413, %s23, 1
        %s415 = scalar_lea.vmem %s2, %s414
      $region56: #{mse_niiee_loss.1} parent=51 // pred_fallthru
        _
      // Predicated region
      $region57: #{mse_niiee_loss.1} parent=51 // pred_check
        %p416 = pneg %p143
      $region58: #{mse_niiee_loss.1} parent=51 // pred_check_branch
        %418 = sbr.rel (%p416) target = $region60
      $region59: #{mse_niiee_loss.1} parent=51 // pred_region
        %p419 = scmp.lt.s32.totalorder %s23, 1
        %s420 = scalar_select %p419, %s23, 1
        %s421 = scalar_lea.vmem %s3, %s420
      $region60: #{mse_niiee_loss.1} parent=51 // pred_fallthru
        _
      // Predicated region
      $region61: #{mse_niiee_loss.1} parent=51 // pred_check
        %p422 = pneg %p169
      $region62: #{mse_niiee_loss.1} parent=51 // pred_check_branch
        %424 = sbr.rel (%p422) target = $region64
      $region63: #{mse_niiee_loss.1} parent=51 // pred_region
        %p425 = scmp.lt.s32.totalorder %s23, 1
        %s426 = scalar_select %p425, %s23, 1
        %s427 = scalar_lea.vmem %s4, %s426
      $region64: #{mse_niiee_loss.1} parent=51 // pred_fallthru
        _
      // Predicated region
      $region65: #{mse_niiee_loss.1} parent=51 // pred_check
        %p428 = pneg %p195
      $region66: #{mse_niiee_loss.1} parent=51 // pred_check_branch
        %430 = sbr.rel (%p428) target = $region68
      $region67: #{mse_niiee_loss.1} parent=51 // pred_region
        %p431 = scmp.lt.s32.totalorder %s23, 1
        %s432 = scalar_select %p431, %s23, 1
        %s433 = scalar_lea.vmem %s5, %s432
      $region68: #{mse_niiee_loss.1} parent=51 // pred_fallthru
        _
    $region52: #{mse_niiee_loss.1} parent=5 // pred_fallthru
      _
  $region6: #{mse_niiee_loss.1} parent=0 // loop_footer
    %s16 = sadd.s32 1, %s12
  $region7: #{mse_niiee_loss.1} parent=0 // loop_footer_branch
    %11 = sbr.rel target = $region3
  $region8: #{mse_niiee_loss.1} parent=0 // loop_exit
    _

</llo_original>
